<compile_context>
chip_gen: v7x
topology: tpu7x:2x2x1
jax: 0.10.0
libtpu: 0.0.40
codegen_flags: <defaults>
</compile_context>

<pallas_src>
import functools

import jax
import jax.numpy as jnp
from jax.experimental import pallas as pl
from jax.experimental.pallas import tpu as pltpu


def _double_se_kernel(x_ref, w1_ref, b1_ref, w2_ref, b2_ref, o_ref, *, C, inv_hw):
    # x_ref / o_ref: (bt, C, HWp) block.  All math in f32.
    # squeeze: AdaptiveAvgPool2d(1) == per-channel spatial mean.  HW padding is
    # zeros, so the sum is unaffected; divide by the TRUE spatial size.
    mean = jnp.sum(x_ref[...].astype(jnp.float32), axis=-1) * inv_hw     # (bt, C)

    # Fused excitation: [no-bias cSE path | biased sSE path] in one matmul pair.
    h = jnp.maximum(
        jnp.dot(mean, w1_ref[...], preferred_element_type=jnp.float32)
        + b1_ref[...], 0.0)                                              # (bt, 2r)
    gates = jax.nn.sigmoid(
        jnp.dot(h, w2_ref[...], preferred_element_type=jnp.float32)
        + b2_ref[...])                                                   # (bt, 2C)

    gate = gates[:, :C] + gates[:, C:]                                   # cse + sse

    # out = cse*x + sse*x == (cse + sse) * x  -> one multiply on the big tile.
    # Re-read x_ref here instead of reusing a long-lived f32 temp.
    o_ref[...] = (x_ref[...].astype(jnp.float32)
                  * gate[:, :, None]).astype(o_ref.dtype)


def _pick_batch_tile(N, per_batch_bytes, target_bytes=2 << 20):
    """Largest batch tile whose x-block stays within the byte budget.
    No divisor constraint: the grid uses pl.cdiv and tail rows are masked."""
    bt = max(1, target_bytes // max(per_batch_bytes, 1))
    return int(min(N, bt))


def double_se_block(x, packed):
    """x: (N, C, H, W); packed: dict of fused weights (see pack_params)."""
    N, C, H, W = x.shape
    HW = H * W
    HWp = pl.cdiv(HW, 128) * 128          # lane-dense last dim (multiple of 128)
    two_r = packed["w1"].shape[1]

    xr = x.reshape(N, C, HW)
    if HWp != HW:
        xr = jnp.pad(xr, ((0, 0), (0, 0), (0, HWp - HW)))

    block_bytes = C * HWp * x.dtype.itemsize
    bt = _pick_batch_tile(N, block_bytes)
    grid = (pl.cdiv(N, bt),)

    # 2x double-buffered input + output blocks, plus weights, plus slack.
    w_bytes = sum(int(v.size) * v.dtype.itemsize for v in packed.values())
    vmem_limit = int(min(4 * bt * block_bytes + 2 * w_bytes + (4 << 20), 48 << 20))

    kernel = functools.partial(_double_se_kernel, C=C, inv_hw=1.0 / HW)
    out = pl.pallas_call(
        kernel,
        out_shape=jax.ShapeDtypeStruct((N, C, HWp), x.dtype),
        grid_spec=pltpu.PrefetchScalarGridSpec(
            num_scalar_prefetch=0,
            grid=grid,
            in_specs=[
                pl.BlockSpec((bt, C, HWp), lambda n: (n, 0, 0)),      # x
                pl.BlockSpec((C, two_r), lambda n: (0, 0)),           # W1cat
                pl.BlockSpec((1, two_r), lambda n: (0, 0)),           # b1cat
                pl.BlockSpec((two_r, 2 * C), lambda n: (0, 0)),       # W2blk
                pl.BlockSpec((1, 2 * C), lambda n: (0, 0)),           # b2cat
            ],
            out_specs=pl.BlockSpec((bt, C, HWp), lambda n: (n, 0, 0)),
        ),
        compiler_params=pltpu.CompilerParams(
            dimension_semantics=("parallel",),
            vmem_limit_bytes=vmem_limit),
    )(xr, packed["w1"], packed["b1"], packed["w2"], packed["b2"])

    return out[:, :, :HW].reshape(N, C, H, W)


def pack_params(p):
    """Fuse the two excitation paths into one concatenated / block-diagonal pair."""
    C, r = p["w1n"].shape
    dt = p["w1n"].dtype
    w1 = jnp.concatenate([p["w1n"], p["w1b"]], axis=1)                   # (C, 2r)
    b1 = jnp.concatenate([jnp.zeros((1, r), dt), p["b1"].reshape(1, r)], axis=1)
    w2 = jnp.zeros((2 * r, 2 * C), dt)
    w2 = w2.at[:r, :C].set(p["w2n"]).at[r:, C:].set(p["w2b"])            # block diag
    b2 = jnp.concatenate([jnp.zeros((1, C), dt), p["b2"].reshape(1, C)], axis=1)
    return {"w1": w1, "b1": b1, "w2": w2, "b2": b2}


def reference(x, p):
    # Plain-JAX reference mirroring the PyTorch forward (raw, unfused params).
    mean = jnp.mean(x, axis=(2, 3))                                      # (N, C)
    h = jnp.maximum(mean @ p["w1n"], 0.0)
    cse = jax.nn.sigmoid(h @ p["w2n"])
    hb = jnp.maximum(mean @ p["w1b"] + p["b1"], 0.0)
    sse = jax.nn.sigmoid(hb @ p["w2b"] + p["b2"])
    return cse[:, :, None, None] * x + sse[:, :, None, None] * x


def init_params(key, in_channels, reduction_ratio=16):
    r = in_channels // reduction_ratio
    ks = jax.random.split(key, 6)
    s1 = 1.0 / jnp.sqrt(in_channels)
    s2 = 1.0 / jnp.sqrt(max(r, 1))
    # PyTorch Conv2d weight is (out, in, 1, 1); we store transposed (in, out).
    return {
        "w1n": jax.random.uniform(ks[0], (in_channels, r), jnp.float32, -s1, s1),
        "w2n": jax.random.uniform(ks[1], (r, in_channels), jnp.float32, -s2, s2),
        "w1b": jax.random.uniform(ks[2], (in_channels, r), jnp.float32, -s1, s1),
        "b1": jax.random.uniform(ks[3], (1, r), jnp.float32, -s1, s1),
        "w2b": jax.random.uniform(ks[4], (r, in_channels), jnp.float32, -s2, s2),
        "b2": jax.random.uniform(ks[5], (1, in_channels), jnp.float32, -s2, s2),
    }


if __name__ == "__main__":
    key = jax.random.PRNGKey(0)
    k_x, k_p = jax.random.split(key)

    N, C, H, W = 2, 32, 16, 16          # C=32 -> reduced dim r = 32 // 16 = 2
    x = jax.random.normal(k_x, (N, C, H, W), dtype=jnp.float32)
    params = init_params(k_p, C, reduction_ratio=16)
    packed = pack_params(params)

    out = double_se_block(x, packed)
    out = jax.block_until_ready(out)

    ref = reference(x, params)
    assert out.shape == (N, C, H, W)
    assert jnp.allclose(out, ref, atol=1e-5, rtol=1e-5), (
        float(jnp.max(jnp.abs(out - ref))))

    print("KERNEL_OK")
</pallas_src>

<mosaic_0001>
module attributes {stable_mosaic.version = 11 : i64} {
  func.func @_double_se_kernel(%arg0: i32, %arg1: memref<2x32x256xf32, #tpu.memory_space<vmem>>, %arg2: memref<32x4xf32, #tpu.memory_space<vmem>>, %arg3: memref<1x4xf32, #tpu.memory_space<vmem>>, %arg4: memref<4x64xf32, #tpu.memory_space<vmem>>, %arg5: memref<1x64xf32, #tpu.memory_space<vmem>>, %arg6: memref<2x32x256xf32, #tpu.memory_space<vmem>>) attributes {dimension_semantics = [#tpu.dimension_semantics<parallel>], iteration_bounds = array<i64: 1>, scalar_prefetch = 0 : i64, scratch_operands = 0 : i64, tpu.core_type = #tpu.core_type<tc>, window_params = [{transform_indices = @transform_0, window_bounds = array<i64: 2, 32, 256>}, {pipeline_mode = #tpu.pipeline_mode<synchronous>, transform_indices = @transform_1, window_bounds = array<i64: 32, 4>}, {pipeline_mode = #tpu.pipeline_mode<synchronous>, transform_indices = @transform_2, window_bounds = array<i64: 1, 4>}, {pipeline_mode = #tpu.pipeline_mode<synchronous>, transform_indices = @transform_3, window_bounds = array<i64: 4, 64>}, {pipeline_mode = #tpu.pipeline_mode<synchronous>, transform_indices = @transform_4, window_bounds = array<i64: 1, 64>}, {transform_indices = @transform_5, window_bounds = array<i64: 2, 32, 256>}]} {
    %c0 = arith.constant 0 : index
    %c0_0 = arith.constant 0 : index
    %c0_1 = arith.constant 0 : index
    %0 = vector.load %arg1[%c0, %c0_0, %c0_1] : memref<2x32x256xf32, #tpu.memory_space<vmem>>, vector<2x32x256xf32>
    %cst = arith.constant dense<0.000000e+00> : vector<2x32xf32>
    %1 = vector.multi_reduction <add>, %0, %cst [2] : vector<2x32x256xf32> to vector<2x32xf32>
    %cst_2 = arith.constant 3.906250e-03 : f32
    %2 = vector.broadcast %cst_2 : f32 to vector<2x32xf32>
    %3 = arith.mulf %1, %2 : vector<2x32xf32>
    %c0_3 = arith.constant 0 : index
    %c0_4 = arith.constant 0 : index
    %4 = vector.load %arg2[%c0_3, %c0_4] : memref<32x4xf32, #tpu.memory_space<vmem>>, vector<32x4xf32>
    %cst_5 = arith.constant dense<0.000000e+00> : vector<2x4xf32>
    %5 = tpu.matmul %3, %4, %cst_5 {dimension_numbers = #tpu.dot_dimension_numbers<[1], [0], [0], [1], [0, 0, 1, 1], [], []>} : vector<2x32xf32>, vector<32x4xf32>, vector<2x4xf32> -> vector<2x4xf32>
    %c0_6 = arith.constant 0 : index
    %c0_7 = arith.constant 0 : index
    %6 = vector.load %arg3[%c0_6, %c0_7] : memref<1x4xf32, #tpu.memory_space<vmem>>, vector<1x4xf32>
    %7 = vector.broadcast %6 : vector<1x4xf32> to vector<2x4xf32>
    %8 = arith.addf %5, %7 : vector<2x4xf32>
    %cst_8 = arith.constant 0.000000e+00 : f32
    %9 = vector.broadcast %cst_8 : f32 to vector<2x4xf32>
    %10 = arith.maximumf %8, %9 : vector<2x4xf32>
    %c0_9 = arith.constant 0 : index
    %c0_10 = arith.constant 0 : index
    %11 = vector.load %arg4[%c0_9, %c0_10] : memref<4x64xf32, #tpu.memory_space<vmem>>, vector<4x64xf32>
    %cst_11 = arith.constant dense<0.000000e+00> : vector<2x64xf32>
    %12 = tpu.matmul %10, %11, %cst_11 {dimension_numbers = #tpu.dot_dimension_numbers<[1], [0], [0], [1], [0, 0, 1, 1], [], []>} : vector<2x4xf32>, vector<4x64xf32>, vector<2x64xf32> -> vector<2x64xf32>
    %c0_12 = arith.constant 0 : index
    %c0_13 = arith.constant 0 : index
    %13 = vector.load %arg5[%c0_12, %c0_13] : memref<1x64xf32, #tpu.memory_space<vmem>>, vector<1x64xf32>
    %14 = vector.broadcast %13 : vector<1x64xf32> to vector<2x64xf32>
    %15 = arith.addf %12, %14 : vector<2x64xf32>
    %16 = arith.negf %15 : vector<2x64xf32>
    %17 = math.exp %16 : vector<2x64xf32>
    %cst_14 = arith.constant 1.000000e+00 : f32
    %18 = vector.broadcast %cst_14 : f32 to vector<2x64xf32>
    %19 = arith.addf %18, %17 : vector<2x64xf32>
    %20 = arith.divf %18, %19 : vector<2x64xf32>
    %21 = vector.extract_strided_slice %20 {offsets = [0, 0], sizes = [2, 32], strides = [1, 1]} : vector<2x64xf32> to vector<2x32xf32>
    %22 = vector.extract_strided_slice %20 {offsets = [0, 32], sizes = [2, 32], strides = [1, 1]} : vector<2x64xf32> to vector<2x32xf32>
    %23 = arith.addf %21, %22 : vector<2x32xf32>
    %c0_15 = arith.constant 0 : index
    %c0_16 = arith.constant 0 : index
    %c0_17 = arith.constant 0 : index
    %24 = vector.load %arg1[%c0_15, %c0_16, %c0_17] : memref<2x32x256xf32, #tpu.memory_space<vmem>>, vector<2x32x256xf32>
    %25 = vector.shape_cast %23 : vector<2x32xf32> to vector<2x32x1xf32>
    %26 = vector.broadcast %25 : vector<2x32x1xf32> to vector<2x32x256xf32>
    %27 = arith.mulf %24, %26 : vector<2x32x256xf32>
    %c0_18 = arith.constant 0 : index
    %c0_19 = arith.constant 0 : index
    %c0_20 = arith.constant 0 : index
    %28 = vector.load %arg6[%c0_18, %c0_19, %c0_20] : memref<2x32x256xf32, #tpu.memory_space<vmem>>, vector<2x32x256xf32>
    tpu.vector_store %arg6[%c0_18, %c0_19, %c0_20], %27 {strides = array<i32>} : memref<2x32x256xf32, #tpu.memory_space<vmem>>, vector<2x32x256xf32>,
    return
  }
  func.func @transform_0(%arg0: i32) -> (i32, i32, i32) {
    %c0_i32 = arith.constant 0 : i32
    %c0_i32_0 = arith.constant 0 : i32
    %c0_i32_1 = arith.constant 0 : i32
    return %arg0, %c0_i32, %c0_i32_0 : i32, i32, i32
  }
  func.func @transform_1(%arg0: i32) -> (i32, i32) {
    %c0_i32 = arith.constant 0 : i32
    %c0_i32_0 = arith.constant 0 : i32
    %c0_i32_1 = arith.constant 0 : i32
    return %c0_i32, %c0_i32_0 : i32, i32
  }
  func.func @transform_2(%arg0: i32) -> (i32, i32) {
    %c0_i32 = arith.constant 0 : i32
    %c0_i32_0 = arith.constant 0 : i32
    %c0_i32_1 = arith.constant 0 : i32
    return %c0_i32, %c0_i32_0 : i32, i32
  }
  func.func @transform_3(%arg0: i32) -> (i32, i32) {
    %c0_i32 = arith.constant 0 : i32
    %c0_i32_0 = arith.constant 0 : i32
    %c0_i32_1 = arith.constant 0 : i32
    return %c0_i32, %c0_i32_0 : i32, i32
  }
  func.func @transform_4(%arg0: i32) -> (i32, i32) {
    %c0_i32 = arith.constant 0 : i32
    %c0_i32_0 = arith.constant 0 : i32
    %c0_i32_1 = arith.constant 0 : i32
    return %c0_i32, %c0_i32_0 : i32, i32
  }
  func.func @transform_5(%arg0: i32) -> (i32, i32, i32) {
    %c0_i32 = arith.constant 0 : i32
    %c0_i32_0 = arith.constant 0 : i32
    %c0_i32_1 = arith.constant 0 : i32
    return %arg0, %c0_i32, %c0_i32_0 : i32, i32, i32
  }
}

</mosaic_0001>

<llo_original>
// kernel: tpu_custom_call.1
$region0: #{tpu_custom_call.1}
  #allocation0 [shape = 'u32[]', space=smem, size = 0x4, offset = 0x4, fixed_abs, tag = 'smem constant byte address 0x4 - core index']
  #allocation1 [shape = 'u32[144,128]{1,0:T(1,128)}', space=vmem, size = 0x12000, scoped, tag = 'internal scratch']
  %s0 = inlined_call_operand.hbm [shape: f32[2,32,256], index: 0, kind: input, shape index: {}]
  %s1 = inlined_call_operand.vmem [shape: f32[32,4], index: 1, kind: input, shape index: {}]
  %s2 = inlined_call_operand.vmem [shape: f32[1,4], index: 2, kind: input, shape index: {}]
  %s3 = inlined_call_operand.vmem [shape: f32[4,64], index: 3, kind: input, shape index: {}]
  %s4 = inlined_call_operand.vmem [shape: f32[1,64], index: 4, kind: input, shape index: {}]
  %s5 = inlined_call_operand.hbm [shape: f32[2,32,256], index: 5, kind: output, shape index: {}]
  %s6 = sld [smem:[#allocation0]]
  $region34: #{tpu_custom_call.1} parent=0
    _
  %s8 = ssub.s32 1, %s6
  %s9 = scalar_select 0, %s8, %s6
  $region1: #{tpu_custom_call.1} parent=0
    #allocation2 [shape = 'u8[65536]{0}', space=vmem, size = 0x10000, scoped, tag = 'input window, operand 0, single buffered']
    #allocation3 [shape = 's32[1]{0}', space=sflag, size = 0x4, scoped, tag = 'scoped memory for tpu_custom_call.1']
    #allocation4 [shape = 's32[1]{0}', space=sflag, size = 0x4, scoped, tag = 'scoped memory for tpu_custom_call.1']
    #allocation5 [shape = 'u8[65536]{0}', space=vmem, size = 0x10000, scoped, tag = 'output window, operand 0, single buffered']
    %10 = vsyncpa [#allocation3], 0
    %11 = vsyncpa [#allocation4], 0
    // Predicated region
    $region2: #{tpu_custom_call.1} parent=1 // pred_check
      _
    $region3: #{tpu_custom_call.1} parent=1 // pred_check_branch
      %13 = sbr.rel (0) target = $region5
    $region4: #{tpu_custom_call.1} parent=1 // pred_region
      %s15 = ssub.s32 2048, 2048
      %16 = vsyncadd [#allocation3], %s15
      %s17 = sshll.u32 [#allocation2], 4
      %s18 = int_to_ptr.vmem [resolvable:$true] %s17
      %23 = dma.hbm_to_vmem [thread:$0]  %s0, 2048, %s18, [#allocation3], 256, 256, 16
    $region5: #{tpu_custom_call.1} parent=1 // pred_fallthru
      _
    // Predicated region
    $region6: #{tpu_custom_call.1} parent=1 // pred_check
      _
    $region7: #{tpu_custom_call.1} parent=1 // pred_check_branch
      %25 = sbr.rel (0) target = $region9
    $region8: #{tpu_custom_call.1} parent=1 // pred_region
      _
    $region9: #{tpu_custom_call.1} parent=1 // pred_fallthru
      _
    // Predicated region
    $region10: #{tpu_custom_call.1} parent=1 // pred_check
      _
    $region11: #{tpu_custom_call.1} parent=1 // pred_check_branch
      %27 = sbr.rel (0) target = $region13
    $region12: #{tpu_custom_call.1} parent=1 // pred_region
      _
    $region13: #{tpu_custom_call.1} parent=1 // pred_fallthru
      _
    // Predicated region
    $region14: #{tpu_custom_call.1} parent=1 // pred_check
      _
    $region15: #{tpu_custom_call.1} parent=1 // pred_check_branch
      %29 = sbr.rel (0) target = $region17
    $region16: #{tpu_custom_call.1} parent=1 // pred_region
      _
    $region17: #{tpu_custom_call.1} parent=1 // pred_fallthru
      _
    // Predicated region
    $region18: #{tpu_custom_call.1} parent=1 // pred_check
      _
    $region19: #{tpu_custom_call.1} parent=1 // pred_check_branch
      %31 = sbr.rel (0) target = $region21
    $region20: #{tpu_custom_call.1} parent=1 // pred_region
      _
    $region21: #{tpu_custom_call.1} parent=1 // pred_fallthru
      _
    // Predicated region
    $region22: #{tpu_custom_call.1} parent=1 // pred_check
      _
    $region23: #{tpu_custom_call.1} parent=1 // pred_check_branch
      %33 = sbr.rel (0) target = $region25
    $region24: #{tpu_custom_call.1} parent=1 // pred_region
      %34 = dma.done [#allocation3], 2048
    $region25: #{tpu_custom_call.1} parent=1 // pred_fallthru
      _
    %v35 = vld [vmem:[#allocation2] sm:$0xff]
    %v36 = vld [vmem:[#allocation2 + $0x8] sm:$0xff]
    %v37 = vld [vmem:[#allocation2 + $0x10] sm:$0xff]
    %v38 = vld [vmem:[#allocation2 + $0x18] sm:$0xff]
    %v39 = vld [vmem:[#allocation2 + $0x20] sm:$0xff]
    %v40 = vld [vmem:[#allocation2 + $0x28] sm:$0xff]
    %v41 = vld [vmem:[#allocation2 + $0x30] sm:$0xff]
    %v42 = vld [vmem:[#allocation2 + $0x38] sm:$0xff]
    %v43 = vld [vmem:[#allocation2 + $0x40] sm:$0xff]
    %v44 = vld [vmem:[#allocation2 + $0x48] sm:$0xff]
    %v45 = vld [vmem:[#allocation2 + $0x50] sm:$0xff]
    %v46 = vld [vmem:[#allocation2 + $0x58] sm:$0xff]
    %v47 = vld [vmem:[#allocation2 + $0x60] sm:$0xff]
    %v48 = vld [vmem:[#allocation2 + $0x68] sm:$0xff]
    %v49 = vld [vmem:[#allocation2 + $0x70] sm:$0xff]
    %v50 = vld [vmem:[#allocation2 + $0x78] sm:$0xff]
    %v51 = vadd.f32 %v35, %v36
    %52 = vadd.xlane.f32.xlu0 %v51
    %v53 = vpop.xlane.xlu0 %52
    %v54 = vadd.f32 %v37, %v38
    %55 = vadd.xlane.f32.xlu0 %v54
    %v56 = vpop.xlane.xlu0 %55
    %v57 = vadd.f32 %v39, %v40
    %58 = vadd.xlane.f32.xlu0 %v57
    %v59 = vpop.xlane.xlu0 %58
    %v60 = vadd.f32 %v41, %v42
    %61 = vadd.xlane.f32.xlu0 %v60
    %v62 = vpop.xlane.xlu0 %61
    %v63 = vadd.f32 %v43, %v44
    %64 = vadd.xlane.f32.xlu0 %v63
    %v65 = vpop.xlane.xlu0 %64
    %v66 = vadd.f32 %v45, %v46
    %67 = vadd.xlane.f32.xlu0 %v66
    %v68 = vpop.xlane.xlu0 %67
    %v69 = vadd.f32 %v47, %v48
    %70 = vadd.xlane.f32.xlu0 %v69
    %v71 = vpop.xlane.xlu0 %70
    %v72 = vadd.f32 %v49, %v50
    %73 = vadd.xlane.f32.xlu0 %v72
    %v74 = vpop.xlane.xlu0 %73
    %v75 = vmul.f32 %v53, 0.00390625
    %v76 = vmul.f32 %v56, 0.00390625
    %v77 = vmul.f32 %v59, 0.00390625
    %v78 = vmul.f32 %v62, 0.00390625
    %v79 = vmul.f32 %v65, 0.00390625
    %v80 = vmul.f32 %v68, 0.00390625
    %v81 = vmul.f32 %v71, 0.00390625
    %v82 = vmul.f32 %v74, 0.00390625
    %v83 = vld [vmem:[%s1] sm:$0xff]
    %v84 = vld [vmem:[%s1 + $0x8] sm:$0xff]
    %v85 = vld [vmem:[%s1 + $0x10] sm:$0xff]
    %v86 = vld [vmem:[%s1 + $0x18] sm:$0xff]
    %v87 = vld [vmem:[%s2] sm:$0x1]
    %v89 = vlaneseq
    %v90 = vshrl.u32 %v89, 7
    %v91 = vsub.s32 0, %v90
    %v92 = vrot.slane %v87, %v91
    %v102 = vlaneseq
    %v103 = vand.u32 %v102, 127
    %v104 = vlaneseq
    %v105 = vshrl.u32 %v104, 7
    %v106 = vsub.s32 %v103, %v105
    %v107 = vrot.slane %v75, %v106
    %v108 = vadd.s32 %v103, 4294967288
    %v109 = vlaneseq
    %v110 = vshrl.u32 %v109, 7
    %v111 = vsub.s32 %v108, %v110
    %v112 = vrot.slane %v76, %v111
    %vm113 = vcmask 130112
    %v114 = vsel %vm113, %v112, %v107
    %v115 = vadd.s32 %v103, 4294967280
    %v116 = vlaneseq
    %v117 = vshrl.u32 %v116, 7
    %v118 = vsub.s32 %v115, %v117
    %v119 = vrot.slane %v77, %v118
    %vm120 = vcmask 195712
    %v121 = vsel %vm120, %v119, %v114
    %v122 = vadd.s32 %v103, 4294967272
    %v123 = vlaneseq
    %v124 = vshrl.u32 %v123, 7
    %v125 = vsub.s32 %v122, %v124
    %v126 = vrot.slane %v78, %v125
    %vm127 = vcmask 261312
    %v128 = vsel %vm127, %v126, %v121
    %v129 = vlaneseq
    %v130 = vshrl.u32 %v129, 7
    %v131 = vsub.s32 %v103, %v130
    %v132 = vrot.slane %v79, %v131
    %v133 = vlaneseq
    %v134 = vshrl.u32 %v133, 7
    %v135 = vsub.s32 %v108, %v134
    %v136 = vrot.slane %v80, %v135
    %v137 = vsel %vm113, %v136, %v132
    %v138 = vlaneseq
    %v139 = vshrl.u32 %v138, 7
    %v140 = vsub.s32 %v115, %v139
    %v141 = vrot.slane %v81, %v140
    %v142 = vsel %vm120, %v141, %v137
    %v143 = vlaneseq
    %v144 = vshrl.u32 %v143, 7
    %v145 = vsub.s32 %v122, %v144
    %v146 = vrot.slane %v82, %v145
    %v147 = vsel %vm127, %v146, %v142
    %vm148 = vcmask 1041409
    %v149 = vsel %vm148, %v147, %v128
    %vm150 = vcmask 261120
    %v151 = vsel %vm150, %v149, 0
    %153 = vmatprep.subr.mxu0 0.0
    %154 = vmatpush1.msra.mxu0 %v83
    %155 = vmatprep.subr.mxu0 0.0
    %156 = vmatpush1.msra.mxu0 %v84
    %157 = vmatprep.subr.mxu0 0.0
    %158 = vmatpush1.msra.mxu0 %v85
    %159 = vmatprep.subr.mxu0 0.0
    %160 = vmatpush1.msra.mxu0 %v86
    %161 = vmatprep.subr.mxu0 0.0
    %162 = vmatpush1.msra.mxu0 0.0
    %163 = vmatprep.subr.mxu0 0.0
    %164 = vmatpush1.msra.mxu0 0.0
    %165 = vmatprep.subr.mxu0 0.0
    %166 = vmatpush1.msra.mxu0 0.0
    %167 = vmatprep.subr.mxu0 0.0
    %168 = vmatpush1.msra.mxu0 0.0
    %169 = vmatprep.subr.mxu0 0.0
    %170 = vmatpush1.msra.mxu0 0.0
    %171 = vmatprep.subr.mxu0 0.0
    %172 = vmatpush1.msra.mxu0 0.0
    %173 = vmatprep.subr.mxu0 0.0
    %174 = vmatpush1.msra.mxu0 0.0
    %175 = vmatprep.subr.mxu0 0.0
    %176 = vmatpush1.msra.mxu0 0.0
    %177 = vmatprep.subr.mxu0 0.0
    %178 = vmatpush1.msra.mxu0 0.0
    %179 = vmatprep.subr.mxu0 0.0
    %180 = vmatpush1.msra.mxu0 0.0
    %181 = vmatprep.subr.mxu0 0.0
    %182 = vmatpush1.msra.mxu0 0.0
    %183 = vmatprep.subr.mxu0 0.0
    %184 = vmatpush1.msra.mxu0 0.0
    %185 = vmatprep.subr.mxu0 0.0
    %186 = vmatpush1.msra.mxu0 0.0
    %187 = vmatprep.subr.mxu0 0.0
    %188 = vmatpush1.msra.mxu0 0.0
    %189 = vmatprep.subr.mxu0 0.0
    %190 = vmatpush1.msra.mxu0 0.0
    %191 = vmatprep.subr.mxu0 0.0
    %192 = vmatpush1.msra.mxu0 0.0
    %193 = vmatprep.subr.mxu0 0.0
    %194 = vmatpush1.msra.mxu0 0.0
    %195 = vmatprep.subr.mxu0 0.0
    %196 = vmatpush1.msra.mxu0 0.0
    %197 = vmatprep.subr.mxu0 0.0
    %198 = vmatpush1.msra.mxu0 0.0
    %199 = vmatprep.subr.mxu0 0.0
    %200 = vmatpush1.msra.mxu0 0.0
    %201 = vmatprep.subr.mxu0 0.0
    %202 = vmatpush1.msra.mxu0 0.0
    %203 = vmatprep.subr.mxu0 0.0
    %204 = vmatpush1.msra.mxu0 0.0
    %205 = vmatprep.subr.mxu0 0.0
    %206 = vmatpush1.msra.mxu0 0.0
    %207 = vmatprep.subr.mxu0 0.0
    %208 = vmatpush1.msra.mxu0 0.0
    %209 = vmatprep.subr.mxu0 0.0
    %210 = vmatpush1.msra.mxu0 0.0
    %211 = vmatprep.subr.mxu0 0.0
    %212 = vmatpush1.msra.mxu0 0.0
    %213 = vmatprep.subr.mxu0 0.0
    %214 = vmatpush1.msra.mxu0 0.0
    %215 = vmatprep.subr.mxu0 0.0
    %216 = vmatpush1.msra.mxu0 0.0
    %217 = vmatprep.mubr.f32.mxu0 0.0
    %218 = vmatmul.mubr.f32.gmra.mrb[0].mxu0 %v151
    %v219 = vpop.f32.mrb[0].mxu0
    %v220 = vadd.f32 %v92, %v219
    %v221 = vpop.f32.mrb[0].mxu0
    %222 = vdwg.mxu0
    %v223 = vmax.f32 %v220, 0.0
    %v224 = vld [vmem:[%s3] sm:$0xf]
    %v225 = vld [vmem:[%s4] sm:$0x1]
    %v227 = vlaneseq
    %v228 = vshrl.u32 %v227, 7
    %v229 = vsub.s32 0, %v228
    %v230 = vrot.slane %v225, %v229
    %vm232 = vcmask 31744
    %v234 = vsel %vm232, %v223, 0
    %vm236 = vcmask 1043456
    %v238 = vsel %vm236, %v224, 0
    %240 = vmatprep.subr.mxu0 0.0
    %241 = vmatpush1.msra.mxu0 %v238
    %242 = vmatprep.subr.mxu0 0.0
    %243 = vmatpush1.msra.mxu0 0.0
    %244 = vmatprep.subr.mxu0 0.0
    %245 = vmatpush1.msra.mxu0 0.0
    %246 = vmatprep.subr.mxu0 0.0
    %247 = vmatpush1.msra.mxu0 0.0
    %248 = vmatprep.subr.mxu0 0.0
    %249 = vmatpush1.msra.mxu0 0.0
    %250 = vmatprep.subr.mxu0 0.0
    %251 = vmatpush1.msra.mxu0 0.0
    %252 = vmatprep.subr.mxu0 0.0
    %253 = vmatpush1.msra.mxu0 0.0
    %254 = vmatprep.subr.mxu0 0.0
    %255 = vmatpush1.msra.mxu0 0.0
    %256 = vmatprep.subr.mxu0 0.0
    %257 = vmatpush1.msra.mxu0 0.0
    %258 = vmatprep.subr.mxu0 0.0
    %259 = vmatpush1.msra.mxu0 0.0
    %260 = vmatprep.subr.mxu0 0.0
    %261 = vmatpush1.msra.mxu0 0.0
    %262 = vmatprep.subr.mxu0 0.0
    %263 = vmatpush1.msra.mxu0 0.0
    %264 = vmatprep.subr.mxu0 0.0
    %265 = vmatpush1.msra.mxu0 0.0
    %266 = vmatprep.subr.mxu0 0.0
    %267 = vmatpush1.msra.mxu0 0.0
    %268 = vmatprep.subr.mxu0 0.0
    %269 = vmatpush1.msra.mxu0 0.0
    %270 = vmatprep.subr.mxu0 0.0
    %271 = vmatpush1.msra.mxu0 0.0
    %272 = vmatprep.subr.mxu0 0.0
    %273 = vmatpush1.msra.mxu0 0.0
    %274 = vmatprep.subr.mxu0 0.0
    %275 = vmatpush1.msra.mxu0 0.0
    %276 = vmatprep.subr.mxu0 0.0
    %277 = vmatpush1.msra.mxu0 0.0
    %278 = vmatprep.subr.mxu0 0.0
    %279 = vmatpush1.msra.mxu0 0.0
    %280 = vmatprep.subr.mxu0 0.0
    %281 = vmatpush1.msra.mxu0 0.0
    %282 = vmatprep.subr.mxu0 0.0
    %283 = vmatpush1.msra.mxu0 0.0
    %284 = vmatprep.subr.mxu0 0.0
    %285 = vmatpush1.msra.mxu0 0.0
    %286 = vmatprep.subr.mxu0 0.0
    %287 = vmatpush1.msra.mxu0 0.0
    %288 = vmatprep.subr.mxu0 0.0
    %289 = vmatpush1.msra.mxu0 0.0
    %290 = vmatprep.subr.mxu0 0.0
    %291 = vmatpush1.msra.mxu0 0.0
    %292 = vmatprep.subr.mxu0 0.0
    %293 = vmatpush1.msra.mxu0 0.0
    %294 = vmatprep.subr.mxu0 0.0
    %295 = vmatpush1.msra.mxu0 0.0
    %296 = vmatprep.subr.mxu0 0.0
    %297 = vmatpush1.msra.mxu0 0.0
    %298 = vmatprep.subr.mxu0 0.0
    %299 = vmatpush1.msra.mxu0 0.0
    %300 = vmatprep.subr.mxu0 0.0
    %301 = vmatpush1.msra.mxu0 0.0
    %302 = vmatprep.subr.mxu0 0.0
    %303 = vmatpush1.msra.mxu0 0.0
    %304 = vmatprep.mubr.f32.mxu0 0.0
    %305 = vmatmul.mubr.f32.gmra.mrb[0].mxu0 %v234
    %v306 = vpop.f32.mrb[0].mxu0
    %v307 = vadd.f32 %v230, %v306
    %v308 = vpop.f32.mrb[0].mxu0
    %309 = vdwg.mxu0
    %v310 = vxor.u32 %v307, 2147483648
    %v311 = vmul.f32 %v310, 1.442695
    %v312 = vpow.pop %v311
    %v313 = vadd.f32 %v312, 1.0
    %v314 = vrcp.pop %v313
    %v315 = vmul.f32 1.0, %v314
    %317 = vrot.lane.b32.xlu0 %v315, 96
    %v318 = vpop.permute.xlu0 %317
    %v320 = vadd.f32 %v315, %v318
    %v321 = vlaneseq
    %v322 = vshrl.u32 %v321, 7
    %v323 = vsub.s32 0, %v322
    %v324 = vrot.slane %v320, %v323
    %326 = vbcast.lane.b32.xlu0 %v324, 256
    %v327 = vpop.permute.xlu0 %326
    %s329 = sor.u32 256, 8
    %330 = vbcast.lane.b32.xlu0 %v324, %s329
    %v331 = vpop.permute.xlu0 %330
    %s333 = sor.u32 256, 16
    %334 = vbcast.lane.b32.xlu0 %v324, %s333
    %v335 = vpop.permute.xlu0 %334
    %s337 = sor.u32 256, 24
    %338 = vbcast.lane.b32.xlu0 %v324, %s337
    %v339 = vpop.permute.xlu0 %338
    %v340 = vlaneseq
    %v341 = vshrl.u32 %v340, 7
    %v342 = vsub.s32 1, %v341
    %v343 = vrot.slane %v320, %v342
    %345 = vbcast.lane.b32.xlu0 %v343, 256
    %v346 = vpop.permute.xlu0 %345
    %s348 = sor.u32 256, 8
    %349 = vbcast.lane.b32.xlu0 %v343, %s348
    %v350 = vpop.permute.xlu0 %349
    %s352 = sor.u32 256, 16
    %353 = vbcast.lane.b32.xlu0 %v343, %s352
    %v354 = vpop.permute.xlu0 %353
    %s356 = sor.u32 256, 24
    %357 = vbcast.lane.b32.xlu0 %v343, %s356
    %v358 = vpop.permute.xlu0 %357
    %v359 = vmul.f32 %v35, %v327
    %v360 = vmul.f32 %v36, %v327
    %v361 = vmul.f32 %v37, %v331
    %v362 = vmul.f32 %v38, %v331
    %v363 = vmul.f32 %v39, %v335
    %v364 = vmul.f32 %v40, %v335
    %v365 = vmul.f32 %v41, %v339
    %v366 = vmul.f32 %v42, %v339
    %v367 = vmul.f32 %v43, %v346
    %v368 = vmul.f32 %v44, %v346
    %v369 = vmul.f32 %v45, %v350
    %v370 = vmul.f32 %v46, %v350
    %v371 = vmul.f32 %v47, %v354
    %v372 = vmul.f32 %v48, %v354
    %v373 = vmul.f32 %v49, %v358
    %v374 = vmul.f32 %v50, %v358
    %375 = vst [vmem:[#allocation5] sm:$0xff] %v359
    %376 = vst [vmem:[#allocation5 + $0x8] sm:$0xff] %v360
    %377 = vst [vmem:[#allocation5 + $0x10] sm:$0xff] %v361
    %378 = vst [vmem:[#allocation5 + $0x18] sm:$0xff] %v362
    %379 = vst [vmem:[#allocation5 + $0x20] sm:$0xff] %v363
    %380 = vst [vmem:[#allocation5 + $0x28] sm:$0xff] %v364
    %381 = vst [vmem:[#allocation5 + $0x30] sm:$0xff] %v365
    %382 = vst [vmem:[#allocation5 + $0x38] sm:$0xff] %v366
    %383 = vst [vmem:[#allocation5 + $0x40] sm:$0xff] %v367
    %384 = vst [vmem:[#allocation5 + $0x48] sm:$0xff] %v368
    %385 = vst [vmem:[#allocation5 + $0x50] sm:$0xff] %v369
    %386 = vst [vmem:[#allocation5 + $0x58] sm:$0xff] %v370
    %387 = vst [vmem:[#allocation5 + $0x60] sm:$0xff] %v371
    %388 = vst [vmem:[#allocation5 + $0x68] sm:$0xff] %v372
    %389 = vst [vmem:[#allocation5 + $0x70] sm:$0xff] %v373
    %390 = vst [vmem:[#allocation5 + $0x78] sm:$0xff] %v374
    // Predicated region
    $region26: #{tpu_custom_call.1} parent=1 // pred_check
      _
    $region27: #{tpu_custom_call.1} parent=1 // pred_check_branch
      %392 = sbr.rel (0) target = $region29
    $region28: #{tpu_custom_call.1} parent=1 // pred_region
      %s394 = ssub.s32 2048, 2048
      %395 = vsyncadd [#allocation4], %s394
      %s396 = sshll.u32 [#allocation5], 4
      %s397 = int_to_ptr.vmem [resolvable:$true] %s396
      %402 = dma.vmem_to_hbm [thread:$0]  %s397, 2048, %s5, [#allocation4], 256, 256, 16
    $region29: #{tpu_custom_call.1} parent=1 // pred_fallthru
      _
    // Predicated region
    $region30: #{tpu_custom_call.1} parent=1 // pred_check
      _
    $region31: #{tpu_custom_call.1} parent=1 // pred_check_branch
      %404 = sbr.rel (0) target = $region33
    $region32: #{tpu_custom_call.1} parent=1 // pred_region
      %405 = dma.done [#allocation4], 2048
    $region33: #{tpu_custom_call.1} parent=1 // pred_fallthru
      _
    %406 = vsyncpa [#allocation3], 1
    %407 = vsyncpa [#allocation4], 1

</llo_original>
